<compile_context>
chip_gen: v7x
topology: tpu7x:2x2x1
jax: 0.10.0
libtpu: 0.0.40
codegen_flags: <defaults>
</compile_context>

<pallas_src>
import functools

import jax
import jax.numpy as jnp
from jax.experimental import pallas as pl
from jax.experimental.pallas import tpu as pltpu


def _dscnn_kernel(x_ref, wdw_ref, bdw_ref, wpw_ref, bpw_ref, o_ref, *,
                  kernel_size: int, dilation: int):
    """One grid step = `batch_tile` independent batch slices.

    x_ref  : (Bb, D, T)  input, native (channel, time) layout
    wdw_ref: (K, D, 1)   depthwise weights (tap, channel, 1)
    bdw_ref: (D, 1)      depthwise bias
    wpw_ref: (D, D)      pointwise weights (out_ch, in_ch)
    bpw_ref: (D, 1)      pointwise bias
    o_ref  : (Bb, D, T)  output, native layout
    """
    Bb, D, T = x_ref.shape
    pad = (kernel_size - 1) * dilation

    # ---- hoisted parameter loads / broadcasts: once per grid step, not per batch
    w_pw = wpw_ref[...].astype(jnp.float32)                               # (D, D)
    bias_dw = jnp.broadcast_to(bdw_ref[...].astype(jnp.float32), (D, T))  # (D, T)
    bias_pw = jnp.broadcast_to(bpw_ref[...].astype(jnp.float32), (D, T))  # (D, T)
    w_taps = [wdw_ref[k].astype(jnp.float32) for k in range(kernel_size)]  # K x (D, 1)

    def one_batch(b):
        xb = x_ref[b].astype(jnp.float32)                                 # (D, T)

        # Depthwise causal conv:
        #   acc[c, t] = b_dw[c] + sum_k w_dw[c, k] * x[c, t - (K-1-k)*dilation]
        # Each tap is a static right-shift along the time (lane) axis with zero fill.
        acc = bias_dw
        for k in range(kernel_size):
            s = pad - k * dilation            # static shift for this tap
            if s == 0:
                shifted = xb
            elif s >= T:
                shifted = jnp.zeros((D, T), jnp.float32)   # tap reads only the zero pad
            else:
                shifted = jnp.concatenate(
                    [jnp.zeros((D, s), jnp.float32), xb[:, :T - s]], axis=1)
            acc = acc + w_taps[k] * shifted

        # Pointwise 1x1 conv = channel matmul on the MXU; layouts already match.
        pw = jnp.dot(w_pw, acc, preferred_element_type=jnp.float32) + bias_pw

        # TODO(synk): training-mode dropout (random mask) not implemented; eval identity.
        o_ref[b] = (jnp.maximum(pw, 0.0) + xb).astype(o_ref.dtype)

    if Bb <= 8:                               # small tiles: fully static unroll
        for b in range(Bb):
            one_batch(b)
    else:                                     # large tiles: rolled loop, bounded live ranges
        def loop_body(b, carry):
            one_batch(b)
            return carry
        jax.lax.fori_loop(0, Bb, loop_body, 0)


def _pick_batch_tile(B: int, D: int, T: int, itemsize: int,
                     budget_bytes: int = 20 * 1024 * 1024) -> int:
    """Largest divisor of B whose double-buffered in+out VMEM footprint fits."""
    padded_slab = (-(-D // 8) * 8) * (-(-T // 128) * 128) * itemsize  # VMEM bytes / batch
    per_batch = 4 * padded_slab                # in + out, each double-buffered
    max_tile = max(1, budget_bytes // per_batch)
    bt = 1
    for d in range(1, B + 1):
        if B % d == 0 and d <= max_tile:
            bt = d
    # Prefer >= 2 grid steps (keeps both v7x TensorCores fed) unless the halved
    # step would be so small that per-step overhead starts to matter.
    if bt == B and B > 1:
        factors = [p for p in range(2, B + 1) if B % p == 0]
        half = B // factors[0]
        if half * D * T * itemsize >= (512 * 1024):
            bt = half
    return bt


def ds_cnn_block(x_bdt, w_dw, b_dw, w_pw, b_pw, *, kernel_size: int, dilation: int,
                 batch_tile: int | None = None,
                 vmem_limit_bytes: int = 32 * 1024 * 1024):
    """Pallas implementation of DsCnnBlock.forward(x, cache=None).

    Args:
      x_bdt: (B, D, T) float32, PyTorch layout.
      w_dw : (D, 1, K)  depthwise_cnn.weight
      b_dw : (D,)       depthwise_cnn.bias
      w_pw : (D, D, 1)  pointwise_cnn.weight
      b_pw : (D,)       pointwise_cnn.bias
    Returns:
      (out (B, D, T), new_cache (B, D, padding))
    """
    B, D, T = x_bdt.shape
    padding = (kernel_size - 1) * dilation
    assert T > 0  # mirrors PyTorch's `assert y.size(2) > self.padding` for cache=None

    # new_cache straight from x; the padded tensor is never materialized in HBM.
    if padding == 0:
        # TODO(synk): PyTorch's y[:, :, -0:] returns the full tensor; mirrored here.
        new_cache = x_bdt
    elif padding <= T:
        new_cache = x_bdt[:, :, T - padding:]
    else:
        new_cache = jnp.concatenate(
            [jnp.zeros((B, D, padding - T), x_bdt.dtype), x_bdt], axis=2)

    # Parameter layouts for the kernel: channels on the sublane axis everywhere.
    wdw = jnp.transpose(w_dw, (2, 0, 1)).astype(jnp.float32)   # (K, D, 1)
    bdw = b_dw.reshape(D, 1).astype(jnp.float32)               # (D, 1)
    wpw = w_pw[:, :, 0].astype(jnp.float32)                    # (D, D)  (out_ch, in_ch)
    bpw = b_pw.reshape(D, 1).astype(jnp.float32)               # (D, 1)

    if batch_tile is None:
        batch_tile = _pick_batch_tile(B, D, T, x_bdt.dtype.itemsize)
    assert B % batch_tile == 0

    kern = functools.partial(_dscnn_kernel, kernel_size=kernel_size, dilation=dilation)

    out_bdt = pl.pallas_call(
        kern,
        out_shape=jax.ShapeDtypeStruct((B, D, T), x_bdt.dtype),
        grid=(B // batch_tile,),
        in_specs=[
            pl.BlockSpec((batch_tile, D, T), lambda i: (i, 0, 0)),   # x: contiguous HBM slab
            pl.BlockSpec((kernel_size, D, 1), lambda i: (0, 0, 0)),  # depthwise W
            pl.BlockSpec((D, 1), lambda i: (0, 0)),                  # depthwise b
            pl.BlockSpec((D, D), lambda i: (0, 0)),                  # pointwise W
            pl.BlockSpec((D, 1), lambda i: (0, 0)),                  # pointwise b
        ],
        out_specs=pl.BlockSpec((batch_tile, D, T), lambda i: (i, 0, 0)),
        compiler_params=pltpu.CompilerParams(
            dimension_semantics=("parallel",),
            vmem_limit_bytes=vmem_limit_bytes),
    )(x_bdt, wdw, bdw, wpw, bpw)

    return out_bdt, new_cache


def _reference_forward(x_bdt, w_dw, b_dw, w_pw, b_pw, *, kernel_size, dilation):
    """Pure-JAX reference matching the PyTorch semantics (eval-mode dropout)."""
    B, D, T = x_bdt.shape
    padding = (kernel_size - 1) * dilation
    y = jnp.pad(x_bdt, ((0, 0), (0, 0), (padding, 0)))
    new_cache = y[:, :, y.shape[2] - padding:] if padding > 0 else x_bdt
    dw = jnp.zeros((B, D, T), jnp.float32) + b_dw[None, :, None]
    for k in range(kernel_size):
        dw = dw + y[:, :, k * dilation:k * dilation + T] * w_dw[:, 0, k][None, :, None]
    pw = jnp.einsum('oc,bct->bot', w_pw[:, :, 0], dw) + b_pw[None, :, None]
    out = jnp.maximum(pw, 0.0) + x_bdt
    return out, new_cache


if __name__ == "__main__":
    def run_case(B, D, T, K, DIL, batch_tile=None):
        key = jax.random.PRNGKey(0)
        k_x, k_wd, k_bd, k_wp, k_bp = jax.random.split(key, 5)
        x = jax.random.normal(k_x, (B, D, T), dtype=jnp.float32)
        w_dw = 0.3 * jax.random.normal(k_wd, (D, 1, K), dtype=jnp.float32)
        b_dw = 0.1 * jax.random.normal(k_bd, (D,), dtype=jnp.float32)
        w_pw = 0.2 * jax.random.normal(k_wp, (D, D, 1), dtype=jnp.float32)
        b_pw = 0.1 * jax.random.normal(k_bp, (D,), dtype=jnp.float32)

        ref_out, ref_cache = _reference_forward(x, w_dw, b_dw, w_pw, b_pw,
                                                kernel_size=K, dilation=DIL)
        out, cache = ds_cnn_block(x, w_dw, b_dw, w_pw, b_pw,
                                  kernel_size=K, dilation=DIL, batch_tile=batch_tile)
        out = jax.block_until_ready(out)
        cache = jax.block_until_ready(cache)
        pad = (K - 1) * DIL
        assert out.shape == (B, D, T) and cache.shape == (B, D, pad)
        assert jnp.allclose(out, ref_out, atol=1e-4, rtol=1e-4)
        assert jnp.allclose(cache, ref_cache)

    # channel (D) = 32, kernel_size = 3, dilation = 2 -> padding = 4
    run_case(4, 32, 16, 3, 2)                  # auto batch_tile (single fat step)
    run_case(4, 32, 16, 3, 2, batch_tile=2)    # multi-step grid / megacore-parallel path
    run_case(2, 32, 16, 3, 9)                  # padding > T: zero-filled cache + dead tap
    print("KERNEL_OK")
</pallas_src>

<mosaic_0001>
module attributes {stable_mosaic.version = 11 : i64} {
  func.func @_dscnn_kernel(%arg0: i32, %arg1: memref<4x32x16xf32, #tpu.memory_space<vmem>>, %arg2: memref<3x32x1xf32, #tpu.memory_space<vmem>>, %arg3: memref<32x1xf32, #tpu.memory_space<vmem>>, %arg4: memref<32x32xf32, #tpu.memory_space<vmem>>, %arg5: memref<32x1xf32, #tpu.memory_space<vmem>>, %arg6: memref<4x32x16xf32, #tpu.memory_space<vmem>>) attributes {dimension_semantics = [#tpu.dimension_semantics<parallel>], iteration_bounds = array<i64: 1>, scalar_prefetch = 0 : i64, scratch_operands = 0 : i64, tpu.core_type = #tpu.core_type<tc>, window_params = [{transform_indices = @transform_0, window_bounds = array<i64: 4, 32, 16>}, {pipeline_mode = #tpu.pipeline_mode<synchronous>, transform_indices = @transform_1, window_bounds = array<i64: 3, 32, 1>}, {pipeline_mode = #tpu.pipeline_mode<synchronous>, transform_indices = @transform_2, window_bounds = array<i64: 32, 1>}, {pipeline_mode = #tpu.pipeline_mode<synchronous>, transform_indices = @transform_3, window_bounds = array<i64: 32, 32>}, {pipeline_mode = #tpu.pipeline_mode<synchronous>, transform_indices = @transform_4, window_bounds = array<i64: 32, 1>}, {transform_indices = @transform_5, window_bounds = array<i64: 4, 32, 16>}]} {
    %c0 = arith.constant 0 : index
    %c0_0 = arith.constant 0 : index
    %0 = vector.load %arg4[%c0, %c0_0] : memref<32x32xf32, #tpu.memory_space<vmem>>, vector<32x32xf32>
    %c0_1 = arith.constant 0 : index
    %c0_2 = arith.constant 0 : index
    %1 = vector.load %arg3[%c0_1, %c0_2] : memref<32x1xf32, #tpu.memory_space<vmem>>, vector<32x1xf32>
    %2 = vector.shape_cast %1 : vector<32x1xf32> to vector<32x1xf32>
    %3 = vector.broadcast %2 : vector<32x1xf32> to vector<32x16xf32>
    %c0_3 = arith.constant 0 : index
    %c0_4 = arith.constant 0 : index
    %4 = vector.load %arg5[%c0_3, %c0_4] : memref<32x1xf32, #tpu.memory_space<vmem>>, vector<32x1xf32>
    %5 = vector.shape_cast %4 : vector<32x1xf32> to vector<32x1xf32>
    %6 = vector.broadcast %5 : vector<32x1xf32> to vector<32x16xf32>
    %c0_5 = arith.constant 0 : index
    %c0_6 = arith.constant 0 : index
    %c0_7 = arith.constant 0 : index
    %7 = vector.load %arg2[%c0_5, %c0_6, %c0_7] : memref<3x32x1xf32, #tpu.memory_space<vmem>>, vector<1x32x1xf32>
    %8 = vector.shape_cast %7 : vector<1x32x1xf32> to vector<32x1xf32>
    %c1 = arith.constant 1 : index
    %c0_8 = arith.constant 0 : index
    %c0_9 = arith.constant 0 : index
    %9 = vector.load %arg2[%c1, %c0_8, %c0_9] : memref<3x32x1xf32, #tpu.memory_space<vmem>>, vector<1x32x1xf32>
    %10 = vector.shape_cast %9 : vector<1x32x1xf32> to vector<32x1xf32>
    %c2 = arith.constant 2 : index
    %c0_10 = arith.constant 0 : index
    %c0_11 = arith.constant 0 : index
    %11 = vector.load %arg2[%c2, %c0_10, %c0_11] : memref<3x32x1xf32, #tpu.memory_space<vmem>>, vector<1x32x1xf32>
    %12 = vector.shape_cast %11 : vector<1x32x1xf32> to vector<32x1xf32>
    %c0_12 = arith.constant 0 : index
    %c0_13 = arith.constant 0 : index
    %c0_14 = arith.constant 0 : index
    %13 = vector.load %arg1[%c0_12, %c0_13, %c0_14] : memref<4x32x16xf32, #tpu.memory_space<vmem>>, vector<1x32x16xf32>
    %14 = vector.shape_cast %13 : vector<1x32x16xf32> to vector<32x16xf32>
    %cst = arith.constant 0.000000e+00 : f32
    %15 = vector.broadcast %cst : f32 to vector<32x4xf32>
    %16 = vector.extract_strided_slice %14 {offsets = [0, 0], sizes = [32, 12], strides = [1, 1]} : vector<32x16xf32> to vector<32x12xf32>
    %17 = tpu.concatenate %15, %16 in 1 : vector<32x4xf32>, vector<32x12xf32> -> vector<32x16xf32>
    %18 = vector.broadcast %8 : vector<32x1xf32> to vector<32x16xf32>
    %19 = arith.mulf %18, %17 : vector<32x16xf32>
    %20 = arith.addf %3, %19 : vector<32x16xf32>
    %cst_15 = arith.constant 0.000000e+00 : f32
    %21 = vector.broadcast %cst_15 : f32 to vector<32x2xf32>
    %22 = vector.extract_strided_slice %14 {offsets = [0, 0], sizes = [32, 14], strides = [1, 1]} : vector<32x16xf32> to vector<32x14xf32>
    %23 = tpu.concatenate %21, %22 in 1 : vector<32x2xf32>, vector<32x14xf32> -> vector<32x16xf32>
    %24 = vector.broadcast %10 : vector<32x1xf32> to vector<32x16xf32>
    %25 = arith.mulf %24, %23 : vector<32x16xf32>
    %26 = arith.addf %20, %25 : vector<32x16xf32>
    %27 = vector.broadcast %12 : vector<32x1xf32> to vector<32x16xf32>
    %28 = arith.mulf %27, %14 : vector<32x16xf32>
    %29 = arith.addf %26, %28 : vector<32x16xf32>
    %cst_16 = arith.constant dense<0.000000e+00> : vector<32x16xf32>
    %30 = tpu.matmul %0, %29, %cst_16 {dimension_numbers = #tpu.dot_dimension_numbers<[1], [0], [0], [1], [0, 0, 1, 1], [], []>} : vector<32x32xf32>, vector<32x16xf32>, vector<32x16xf32> -> vector<32x16xf32>
    %31 = arith.addf %30, %6 : vector<32x16xf32>
    %cst_17 = arith.constant 0.000000e+00 : f32
    %32 = vector.broadcast %cst_17 : f32 to vector<32x16xf32>
    %33 = arith.maximumf %31, %32 : vector<32x16xf32>
    %34 = arith.addf %33, %14 : vector<32x16xf32>
    %c0_18 = arith.constant 0 : index
    %c0_19 = arith.constant 0 : index
    %c0_20 = arith.constant 0 : index
    %35 = vector.load %arg6[%c0_18, %c0_19, %c0_20] : memref<4x32x16xf32, #tpu.memory_space<vmem>>, vector<1x32x16xf32>
    %36 = vector.shape_cast %35 : vector<1x32x16xf32> to vector<32x16xf32>
    %37 = vector.shape_cast %34 : vector<32x16xf32> to vector<1x32x16xf32>
    tpu.vector_store %arg6[%c0_18, %c0_19, %c0_20], %37 {strides = array<i32>} : memref<4x32x16xf32, #tpu.memory_space<vmem>>, vector<1x32x16xf32>,
    %c1_21 = arith.constant 1 : index
    %c0_22 = arith.constant 0 : index
    %c0_23 = arith.constant 0 : index
    %38 = vector.load %arg1[%c1_21, %c0_22, %c0_23] : memref<4x32x16xf32, #tpu.memory_space<vmem>>, vector<1x32x16xf32>
    %39 = vector.shape_cast %38 : vector<1x32x16xf32> to vector<32x16xf32>
    %cst_24 = arith.constant 0.000000e+00 : f32
    %40 = vector.broadcast %cst_24 : f32 to vector<32x4xf32>
    %41 = vector.extract_strided_slice %39 {offsets = [0, 0], sizes = [32, 12], strides = [1, 1]} : vector<32x16xf32> to vector<32x12xf32>
    %42 = tpu.concatenate %40, %41 in 1 : vector<32x4xf32>, vector<32x12xf32> -> vector<32x16xf32>
    %43 = vector.broadcast %8 : vector<32x1xf32> to vector<32x16xf32>
    %44 = arith.mulf %43, %42 : vector<32x16xf32>
    %45 = arith.addf %3, %44 : vector<32x16xf32>
    %cst_25 = arith.constant 0.000000e+00 : f32
    %46 = vector.broadcast %cst_25 : f32 to vector<32x2xf32>
    %47 = vector.extract_strided_slice %39 {offsets = [0, 0], sizes = [32, 14], strides = [1, 1]} : vector<32x16xf32> to vector<32x14xf32>
    %48 = tpu.concatenate %46, %47 in 1 : vector<32x2xf32>, vector<32x14xf32> -> vector<32x16xf32>
    %49 = vector.broadcast %10 : vector<32x1xf32> to vector<32x16xf32>
    %50 = arith.mulf %49, %48 : vector<32x16xf32>
    %51 = arith.addf %45, %50 : vector<32x16xf32>
    %52 = vector.broadcast %12 : vector<32x1xf32> to vector<32x16xf32>
    %53 = arith.mulf %52, %39 : vector<32x16xf32>
    %54 = arith.addf %51, %53 : vector<32x16xf32>
    %cst_26 = arith.constant dense<0.000000e+00> : vector<32x16xf32>
    %55 = tpu.matmul %0, %54, %cst_26 {dimension_numbers = #tpu.dot_dimension_numbers<[1], [0], [0], [1], [0, 0, 1, 1], [], []>} : vector<32x32xf32>, vector<32x16xf32>, vector<32x16xf32> -> vector<32x16xf32>
    %56 = arith.addf %55, %6 : vector<32x16xf32>
    %cst_27 = arith.constant 0.000000e+00 : f32
    %57 = vector.broadcast %cst_27 : f32 to vector<32x16xf32>
    %58 = arith.maximumf %56, %57 : vector<32x16xf32>
    %59 = arith.addf %58, %39 : vector<32x16xf32>
    %c1_28 = arith.constant 1 : index
    %c0_29 = arith.constant 0 : index
    %c0_30 = arith.constant 0 : index
    %60 = vector.load %arg6[%c1_28, %c0_29, %c0_30] : memref<4x32x16xf32, #tpu.memory_space<vmem>>, vector<1x32x16xf32>
    %61 = vector.shape_cast %60 : vector<1x32x16xf32> to vector<32x16xf32>
    %62 = vector.shape_cast %59 : vector<32x16xf32> to vector<1x32x16xf32>
    tpu.vector_store %arg6[%c1_28, %c0_29, %c0_30], %62 {strides = array<i32>} : memref<4x32x16xf32, #tpu.memory_space<vmem>>, vector<1x32x16xf32>,
    %c2_31 = arith.constant 2 : index
    %c0_32 = arith.constant 0 : index
    %c0_33 = arith.constant 0 : index
    %63 = vector.load %arg1[%c2_31, %c0_32, %c0_33] : memref<4x32x16xf32, #tpu.memory_space<vmem>>, vector<1x32x16xf32>
    %64 = vector.shape_cast %63 : vector<1x32x16xf32> to vector<32x16xf32>
    %cst_34 = arith.constant 0.000000e+00 : f32
    %65 = vector.broadcast %cst_34 : f32 to vector<32x4xf32>
    %66 = vector.extract_strided_slice %64 {offsets = [0, 0], sizes = [32, 12], strides = [1, 1]} : vector<32x16xf32> to vector<32x12xf32>
    %67 = tpu.concatenate %65, %66 in 1 : vector<32x4xf32>, vector<32x12xf32> -> vector<32x16xf32>
    %68 = vector.broadcast %8 : vector<32x1xf32> to vector<32x16xf32>
    %69 = arith.mulf %68, %67 : vector<32x16xf32>
    %70 = arith.addf %3, %69 : vector<32x16xf32>
    %cst_35 = arith.constant 0.000000e+00 : f32
    %71 = vector.broadcast %cst_35 : f32 to vector<32x2xf32>
    %72 = vector.extract_strided_slice %64 {offsets = [0, 0], sizes = [32, 14], strides = [1, 1]} : vector<32x16xf32> to vector<32x14xf32>
    %73 = tpu.concatenate %71, %72 in 1 : vector<32x2xf32>, vector<32x14xf32> -> vector<32x16xf32>
    %74 = vector.broadcast %10 : vector<32x1xf32> to vector<32x16xf32>
    %75 = arith.mulf %74, %73 : vector<32x16xf32>
    %76 = arith.addf %70, %75 : vector<32x16xf32>
    %77 = vector.broadcast %12 : vector<32x1xf32> to vector<32x16xf32>
    %78 = arith.mulf %77, %64 : vector<32x16xf32>
    %79 = arith.addf %76, %78 : vector<32x16xf32>
    %cst_36 = arith.constant dense<0.000000e+00> : vector<32x16xf32>
    %80 = tpu.matmul %0, %79, %cst_36 {dimension_numbers = #tpu.dot_dimension_numbers<[1], [0], [0], [1], [0, 0, 1, 1], [], []>} : vector<32x32xf32>, vector<32x16xf32>, vector<32x16xf32> -> vector<32x16xf32>
    %81 = arith.addf %80, %6 : vector<32x16xf32>
    %cst_37 = arith.constant 0.000000e+00 : f32
    %82 = vector.broadcast %cst_37 : f32 to vector<32x16xf32>
    %83 = arith.maximumf %81, %82 : vector<32x16xf32>
    %84 = arith.addf %83, %64 : vector<32x16xf32>
    %c2_38 = arith.constant 2 : index
    %c0_39 = arith.constant 0 : index
    %c0_40 = arith.constant 0 : index
    %85 = vector.load %arg6[%c2_38, %c0_39, %c0_40] : memref<4x32x16xf32, #tpu.memory_space<vmem>>, vector<1x32x16xf32>
    %86 = vector.shape_cast %85 : vector<1x32x16xf32> to vector<32x16xf32>
    %87 = vector.shape_cast %84 : vector<32x16xf32> to vector<1x32x16xf32>
    tpu.vector_store %arg6[%c2_38, %c0_39, %c0_40], %87 {strides = array<i32>} : memref<4x32x16xf32, #tpu.memory_space<vmem>>, vector<1x32x16xf32>,
    %c3 = arith.constant 3 : index
    %c0_41 = arith.constant 0 : index
    %c0_42 = arith.constant 0 : index
    %88 = vector.load %arg1[%c3, %c0_41, %c0_42] : memref<4x32x16xf32, #tpu.memory_space<vmem>>, vector<1x32x16xf32>
    %89 = vector.shape_cast %88 : vector<1x32x16xf32> to vector<32x16xf32>
    %cst_43 = arith.constant 0.000000e+00 : f32
    %90 = vector.broadcast %cst_43 : f32 to vector<32x4xf32>
    %91 = vector.extract_strided_slice %89 {offsets = [0, 0], sizes = [32, 12], strides = [1, 1]} : vector<32x16xf32> to vector<32x12xf32>
    %92 = tpu.concatenate %90, %91 in 1 : vector<32x4xf32>, vector<32x12xf32> -> vector<32x16xf32>
    %93 = vector.broadcast %8 : vector<32x1xf32> to vector<32x16xf32>
    %94 = arith.mulf %93, %92 : vector<32x16xf32>
    %95 = arith.addf %3, %94 : vector<32x16xf32>
    %cst_44 = arith.constant 0.000000e+00 : f32
    %96 = vector.broadcast %cst_44 : f32 to vector<32x2xf32>
    %97 = vector.extract_strided_slice %89 {offsets = [0, 0], sizes = [32, 14], strides = [1, 1]} : vector<32x16xf32> to vector<32x14xf32>
    %98 = tpu.concatenate %96, %97 in 1 : vector<32x2xf32>, vector<32x14xf32> -> vector<32x16xf32>
    %99 = vector.broadcast %10 : vector<32x1xf32> to vector<32x16xf32>
    %100 = arith.mulf %99, %98 : vector<32x16xf32>
    %101 = arith.addf %95, %100 : vector<32x16xf32>
    %102 = vector.broadcast %12 : vector<32x1xf32> to vector<32x16xf32>
    %103 = arith.mulf %102, %89 : vector<32x16xf32>
    %104 = arith.addf %101, %103 : vector<32x16xf32>
    %cst_45 = arith.constant dense<0.000000e+00> : vector<32x16xf32>
    %105 = tpu.matmul %0, %104, %cst_45 {dimension_numbers = #tpu.dot_dimension_numbers<[1], [0], [0], [1], [0, 0, 1, 1], [], []>} : vector<32x32xf32>, vector<32x16xf32>, vector<32x16xf32> -> vector<32x16xf32>
    %106 = arith.addf %105, %6 : vector<32x16xf32>
    %cst_46 = arith.constant 0.000000e+00 : f32
    %107 = vector.broadcast %cst_46 : f32 to vector<32x16xf32>
    %108 = arith.maximumf %106, %107 : vector<32x16xf32>
    %109 = arith.addf %108, %89 : vector<32x16xf32>
    %c3_47 = arith.constant 3 : index
    %c0_48 = arith.constant 0 : index
    %c0_49 = arith.constant 0 : index
    %110 = vector.load %arg6[%c3_47, %c0_48, %c0_49] : memref<4x32x16xf32, #tpu.memory_space<vmem>>, vector<1x32x16xf32>
    %111 = vector.shape_cast %110 : vector<1x32x16xf32> to vector<32x16xf32>
    %112 = vector.shape_cast %109 : vector<32x16xf32> to vector<1x32x16xf32>
    tpu.vector_store %arg6[%c3_47, %c0_48, %c0_49], %112 {strides = array<i32>} : memref<4x32x16xf32, #tpu.memory_space<vmem>>, vector<1x32x16xf32>,
    return
  }
  func.func @transform_0(%arg0: i32) -> (i32, i32, i32) {
    %c0_i32 = arith.constant 0 : i32
    %c0_i32_0 = arith.constant 0 : i32
    %c0_i32_1 = arith.constant 0 : i32
    return %arg0, %c0_i32, %c0_i32_0 : i32, i32, i32
  }
  func.func @transform_1(%arg0: i32) -> (i32, i32, i32) {
    %c0_i32 = arith.constant 0 : i32
    %c0_i32_0 = arith.constant 0 : i32
    %c0_i32_1 = arith.constant 0 : i32
    %c0_i32_2 = arith.constant 0 : i32
    return %c0_i32, %c0_i32_0, %c0_i32_1 : i32, i32, i32
  }
  func.func @transform_2(%arg0: i32) -> (i32, i32) {
    %c0_i32 = arith.constant 0 : i32
    %c0_i32_0 = arith.constant 0 : i32
    %c0_i32_1 = arith.constant 0 : i32
    return %c0_i32, %c0_i32_0 : i32, i32
  }
  func.func @transform_3(%arg0: i32) -> (i32, i32) {
    %c0_i32 = arith.constant 0 : i32
    %c0_i32_0 = arith.constant 0 : i32
    %c0_i32_1 = arith.constant 0 : i32
    return %c0_i32, %c0_i32_0 : i32, i32
  }
  func.func @transform_4(%arg0: i32) -> (i32, i32) {
    %c0_i32 = arith.constant 0 : i32
    %c0_i32_0 = arith.constant 0 : i32
    %c0_i32_1 = arith.constant 0 : i32
    return %c0_i32, %c0_i32_0 : i32, i32
  }
  func.func @transform_5(%arg0: i32) -> (i32, i32, i32) {
    %c0_i32 = arith.constant 0 : i32
    %c0_i32_0 = arith.constant 0 : i32
    %c0_i32_1 = arith.constant 0 : i32
    return %arg0, %c0_i32, %c0_i32_0 : i32, i32, i32
  }
}

</mosaic_0001>

<llo_original>
// kernel: tpu_custom_call.1
$region0: #{tpu_custom_call.1}
  #allocation0 [shape = 'u32[]', space=smem, size = 0x4, offset = 0x4, fixed_abs, tag = 'smem constant byte address 0x4 - core index']
  #allocation1 [shape = 'u32[144,128]{1,0:T(1,128)}', space=vmem, size = 0x12000, scoped, tag = 'internal scratch']
  %s0 = inlined_call_operand.vmem [shape: f32[4,32,16], index: 0, kind: input, shape index: {}]
  %s1 = inlined_call_operand.vmem [shape: f32[3,32,1], index: 1, kind: input, shape index: {}]
  %s2 = inlined_call_operand.vmem [shape: f32[32,1], index: 2, kind: input, shape index: {}]
  %s3 = inlined_call_operand.vmem [shape: f32[32,32], index: 3, kind: input, shape index: {}]
  %s4 = inlined_call_operand.vmem [shape: f32[32,1], index: 4, kind: input, shape index: {}]
  %s5 = inlined_call_operand.vmem [shape: f32[4,32,16], index: 5, kind: output, shape index: {}]
  %s6 = sld [smem:[#allocation0]]
  $region30: #{tpu_custom_call.1} parent=0
    _
  %s8 = ssub.s32 1, %s6
  %s9 = scalar_select 0, %s8, %s6
  // Predicated region
  $region2: #{tpu_custom_call.1} parent=0 // pred_check
    _
  $region3: #{tpu_custom_call.1} parent=0 // pred_check_branch
    %11 = sbr.rel (0) target = $region5
  $region4: #{tpu_custom_call.1} parent=0 // pred_region
    _
  $region5: #{tpu_custom_call.1} parent=0 // pred_fallthru
    _
  // Predicated region
  $region6: #{tpu_custom_call.1} parent=0 // pred_check
    _
  $region7: #{tpu_custom_call.1} parent=0 // pred_check_branch
    %13 = sbr.rel (0) target = $region9
  $region8: #{tpu_custom_call.1} parent=0 // pred_region
    _
  $region9: #{tpu_custom_call.1} parent=0 // pred_fallthru
    _
  // Predicated region
  $region10: #{tpu_custom_call.1} parent=0 // pred_check
    _
  $region11: #{tpu_custom_call.1} parent=0 // pred_check_branch
    %15 = sbr.rel (0) target = $region13
  $region12: #{tpu_custom_call.1} parent=0 // pred_region
    _
  $region13: #{tpu_custom_call.1} parent=0 // pred_fallthru
    _
  // Predicated region
  $region14: #{tpu_custom_call.1} parent=0 // pred_check
    _
  $region15: #{tpu_custom_call.1} parent=0 // pred_check_branch
    %17 = sbr.rel (0) target = $region17
  $region16: #{tpu_custom_call.1} parent=0 // pred_region
    _
  $region17: #{tpu_custom_call.1} parent=0 // pred_fallthru
    _
  // Predicated region
  $region18: #{tpu_custom_call.1} parent=0 // pred_check
    _
  $region19: #{tpu_custom_call.1} parent=0 // pred_check_branch
    %19 = sbr.rel (0) target = $region21
  $region20: #{tpu_custom_call.1} parent=0 // pred_region
    _
  $region21: #{tpu_custom_call.1} parent=0 // pred_fallthru
    _
  %v20 = vld [vmem:[%s3] sm:$0xff]
  %v21 = vld [vmem:[%s3 + $0x8] sm:$0xff]
  %v22 = vld [vmem:[%s3 + $0x10] sm:$0xff]
  %v23 = vld [vmem:[%s3 + $0x18] sm:$0xff]
  %v24 = vld [vmem:[%s2] sm:$0xff]
  %v25 = vld [vmem:[%s2 + $0x8] sm:$0xff]
  %v26 = vld [vmem:[%s2 + $0x10] sm:$0xff]
  %v27 = vld [vmem:[%s2 + $0x18] sm:$0xff]
  %29 = vset.pattern.permute.xlu0 0
  %30 = vperm.xlu0 %29, %v24
  %v31 = vpop.permute.xlu0 %30
  %34 = vset.pattern.permute.xlu0 0
  %35 = vperm.xlu0 %34, %v25
  %v36 = vpop.permute.xlu0 %35
  %39 = vset.pattern.permute.xlu0 0
  %40 = vperm.xlu0 %39, %v26
  %v41 = vpop.permute.xlu0 %40
  %44 = vset.pattern.permute.xlu0 0
  %45 = vperm.xlu0 %44, %v27
  %v46 = vpop.permute.xlu0 %45
  %v48 = vld [vmem:[%s4] sm:$0xff]
  %v49 = vld [vmem:[%s4 + $0x8] sm:$0xff]
  %v50 = vld [vmem:[%s4 + $0x10] sm:$0xff]
  %v51 = vld [vmem:[%s4 + $0x18] sm:$0xff]
  %53 = vset.pattern.permute.xlu0 0
  %54 = vperm.xlu0 %53, %v48
  %v55 = vpop.permute.xlu0 %54
  %58 = vset.pattern.permute.xlu0 0
  %59 = vperm.xlu0 %58, %v49
  %v60 = vpop.permute.xlu0 %59
  %63 = vset.pattern.permute.xlu0 0
  %64 = vperm.xlu0 %63, %v50
  %v65 = vpop.permute.xlu0 %64
  %68 = vset.pattern.permute.xlu0 0
  %69 = vperm.xlu0 %68, %v51
  %v70 = vpop.permute.xlu0 %69
  %v72 = vld [vmem:[%s1] sm:$0xff]
  %v73 = vld [vmem:[%s1 + $0x8] sm:$0xff]
  %v74 = vld [vmem:[%s1 + $0x10] sm:$0xff]
  %v75 = vld [vmem:[%s1 + $0x18] sm:$0xff]
  %s76 = scalar_lea.vmem %s1, 32
  %v77 = vld [vmem:[%s76] sm:$0xff]
  %v78 = vld [vmem:[%s76 + $0x8] sm:$0xff]
  %v79 = vld [vmem:[%s76 + $0x10] sm:$0xff]
  %v80 = vld [vmem:[%s76 + $0x18] sm:$0xff]
  %s81 = scalar_lea.vmem %s1, 64
  %v82 = vld [vmem:[%s81] sm:$0xff]
  %v83 = vld [vmem:[%s81 + $0x8] sm:$0xff]
  %v84 = vld [vmem:[%s81 + $0x10] sm:$0xff]
  %v85 = vld [vmem:[%s81 + $0x18] sm:$0xff]
  %v86 = vld [vmem:[%s0] sm:$0xff]
  %v87 = vld [vmem:[%s0 + $0x8] sm:$0xff]
  %v88 = vld [vmem:[%s0 + $0x10] sm:$0xff]
  %v89 = vld [vmem:[%s0 + $0x18] sm:$0xff]
  %94 = vrot.lane.b32.xlu0 %v86, 4
  %v95 = vpop.permute.xlu0 %94
  %96 = vrot.lane.b32.xlu0 %v87, 4
  %v97 = vpop.permute.xlu0 %96
  %98 = vrot.lane.b32.xlu0 %v88, 4
  %v99 = vpop.permute.xlu0 %98
  %100 = vrot.lane.b32.xlu0 %v89, 4
  %v101 = vpop.permute.xlu0 %100
  %vm106 = vcmask 31744
  %v107 = vsel %vm106, 0.0, %v95
  %v108 = vsel %vm106, 0.0, %v97
  %v109 = vsel %vm106, 0.0, %v99
  %v110 = vsel %vm106, 0.0, %v101
  %112 = vset.pattern.permute.xlu0 0
  %113 = vperm.xlu0 %112, %v72
  %v114 = vpop.permute.xlu0 %113
  %117 = vset.pattern.permute.xlu0 0
  %118 = vperm.xlu0 %117, %v73
  %v119 = vpop.permute.xlu0 %118
  %122 = vset.pattern.permute.xlu0 0
  %123 = vperm.xlu0 %122, %v74
  %v124 = vpop.permute.xlu0 %123
  %127 = vset.pattern.permute.xlu0 0
  %128 = vperm.xlu0 %127, %v75
  %v129 = vpop.permute.xlu0 %128
  %v131 = vmul.f32 %v114, %v107
  %v132 = vmul.f32 %v119, %v108
  %v133 = vmul.f32 %v124, %v109
  %v134 = vmul.f32 %v129, %v110
  %v135 = vadd.f32 %v31, %v131
  %v136 = vadd.f32 %v36, %v132
  %v137 = vadd.f32 %v41, %v133
  %v138 = vadd.f32 %v46, %v134
  %139 = vrot.lane.b32.xlu0 %v86, 2
  %v140 = vpop.permute.xlu0 %139
  %141 = vrot.lane.b32.xlu0 %v87, 2
  %v142 = vpop.permute.xlu0 %141
  %143 = vrot.lane.b32.xlu0 %v88, 2
  %v144 = vpop.permute.xlu0 %143
  %145 = vrot.lane.b32.xlu0 %v89, 2
  %v146 = vpop.permute.xlu0 %145
  %vm151 = vcmask 15360
  %v152 = vsel %vm151, 0.0, %v140
  %v153 = vsel %vm151, 0.0, %v142
  %v154 = vsel %vm151, 0.0, %v144
  %v155 = vsel %vm151, 0.0, %v146
  %157 = vset.pattern.permute.xlu0 0
  %158 = vperm.xlu0 %157, %v77
  %v159 = vpop.permute.xlu0 %158
  %162 = vset.pattern.permute.xlu0 0
  %163 = vperm.xlu0 %162, %v78
  %v164 = vpop.permute.xlu0 %163
  %167 = vset.pattern.permute.xlu0 0
  %168 = vperm.xlu0 %167, %v79
  %v169 = vpop.permute.xlu0 %168
  %172 = vset.pattern.permute.xlu0 0
  %173 = vperm.xlu0 %172, %v80
  %v174 = vpop.permute.xlu0 %173
  %v176 = vmul.f32 %v159, %v152
  %v177 = vmul.f32 %v164, %v153
  %v178 = vmul.f32 %v169, %v154
  %v179 = vmul.f32 %v174, %v155
  %v180 = vadd.f32 %v135, %v176
  %v181 = vadd.f32 %v136, %v177
  %v182 = vadd.f32 %v137, %v178
  %v183 = vadd.f32 %v138, %v179
  %185 = vset.pattern.permute.xlu0 0
  %186 = vperm.xlu0 %185, %v82
  %v187 = vpop.permute.xlu0 %186
  %190 = vset.pattern.permute.xlu0 0
  %191 = vperm.xlu0 %190, %v83
  %v192 = vpop.permute.xlu0 %191
  %195 = vset.pattern.permute.xlu0 0
  %196 = vperm.xlu0 %195, %v84
  %v197 = vpop.permute.xlu0 %196
  %200 = vset.pattern.permute.xlu0 0
  %201 = vperm.xlu0 %200, %v85
  %v202 = vpop.permute.xlu0 %201
  %v204 = vmul.f32 %v187, %v86
  %v205 = vmul.f32 %v192, %v87
  %v206 = vmul.f32 %v197, %v88
  %v207 = vmul.f32 %v202, %v89
  %v208 = vadd.f32 %v180, %v204
  %v209 = vadd.f32 %v181, %v205
  %v210 = vadd.f32 %v182, %v206
  %v211 = vadd.f32 %v183, %v207
  %vm212 = vcmask 261120
  %v214 = vsel %vm212, %v20, 0
  %v217 = vsel %vm212, %v21, 0
  %v220 = vsel %vm212, %v22, 0
  %v223 = vsel %vm212, %v23, 0
  %225 = vmatprep.subr.mxu0 0.0
  %226 = vmatpush1.msra.mxu0 %v208
  %227 = vmatprep.subr.mxu0 0.0
  %228 = vmatpush1.msra.mxu0 %v209
  %229 = vmatprep.subr.mxu0 0.0
  %230 = vmatpush1.msra.mxu0 %v210
  %231 = vmatprep.subr.mxu0 0.0
  %232 = vmatpush1.msra.mxu0 %v211
  %233 = vmatprep.subr.mxu0 0.0
  %234 = vmatpush1.msra.mxu0 0.0
  %235 = vmatprep.subr.mxu0 0.0
  %236 = vmatpush1.msra.mxu0 0.0
  %237 = vmatprep.subr.mxu0 0.0
  %238 = vmatpush1.msra.mxu0 0.0
  %239 = vmatprep.subr.mxu0 0.0
  %240 = vmatpush1.msra.mxu0 0.0
  %241 = vmatprep.subr.mxu0 0.0
  %242 = vmatpush1.msra.mxu0 0.0
  %243 = vmatprep.subr.mxu0 0.0
  %244 = vmatpush1.msra.mxu0 0.0
  %245 = vmatprep.subr.mxu0 0.0
  %246 = vmatpush1.msra.mxu0 0.0
  %247 = vmatprep.subr.mxu0 0.0
  %248 = vmatpush1.msra.mxu0 0.0
  %249 = vmatprep.subr.mxu0 0.0
  %250 = vmatpush1.msra.mxu0 0.0
  %251 = vmatprep.subr.mxu0 0.0
  %252 = vmatpush1.msra.mxu0 0.0
  %253 = vmatprep.subr.mxu0 0.0
  %254 = vmatpush1.msra.mxu0 0.0
  %255 = vmatprep.subr.mxu0 0.0
  %256 = vmatpush1.msra.mxu0 0.0
  %257 = vmatprep.subr.mxu0 0.0
  %258 = vmatpush1.msra.mxu0 0.0
  %259 = vmatprep.subr.mxu0 0.0
  %260 = vmatpush1.msra.mxu0 0.0
  %261 = vmatprep.subr.mxu0 0.0
  %262 = vmatpush1.msra.mxu0 0.0
  %263 = vmatprep.subr.mxu0 0.0
  %264 = vmatpush1.msra.mxu0 0.0
  %265 = vmatprep.subr.mxu0 0.0
  %266 = vmatpush1.msra.mxu0 0.0
  %267 = vmatprep.subr.mxu0 0.0
  %268 = vmatpush1.msra.mxu0 0.0
  %269 = vmatprep.subr.mxu0 0.0
  %270 = vmatpush1.msra.mxu0 0.0
  %271 = vmatprep.subr.mxu0 0.0
  %272 = vmatpush1.msra.mxu0 0.0
  %273 = vmatprep.subr.mxu0 0.0
  %274 = vmatpush1.msra.mxu0 0.0
  %275 = vmatprep.subr.mxu0 0.0
  %276 = vmatpush1.msra.mxu0 0.0
  %277 = vmatprep.subr.mxu0 0.0
  %278 = vmatpush1.msra.mxu0 0.0
  %279 = vmatprep.subr.mxu0 0.0
  %280 = vmatpush1.msra.mxu0 0.0
  %281 = vmatprep.subr.mxu0 0.0
  %282 = vmatpush1.msra.mxu0 0.0
  %283 = vmatprep.subr.mxu0 0.0
  %284 = vmatpush1.msra.mxu0 0.0
  %285 = vmatprep.subr.mxu0 0.0
  %286 = vmatpush1.msra.mxu0 0.0
  %287 = vmatprep.subr.mxu0 0.0
  %288 = vmatpush1.msra.mxu0 0.0
  %289 = vmatprep.mubr.f32.mxu0 0.0
  %290 = vmatmul.mubr.f32.gmra.mrb[0].mxu0 %v214
  %v291 = vpop.f32.mrb[0].mxu0
  %v292 = vadd.f32 %v55, %v291
  %v293 = vpop.f32.mrb[0].mxu0
  %294 = vmatprep.mubr.f32.mxu0 0.0
  %295 = vmatmul.mubr.f32.gmra.mrb[0].mxu0 %v217
  %v296 = vpop.f32.mrb[0].mxu0
  %v297 = vadd.f32 %v60, %v296
  %v298 = vpop.f32.mrb[0].mxu0
  %299 = vmatprep.mubr.f32.mxu0 0.0
  %300 = vmatmul.mubr.f32.gmra.mrb[0].mxu0 %v220
  %v301 = vpop.f32.mrb[0].mxu0
  %v302 = vadd.f32 %v65, %v301
  %v303 = vpop.f32.mrb[0].mxu0
  %304 = vmatprep.mubr.f32.mxu0 0.0
  %305 = vmatmul.mubr.f32.gmra.mrb[0].mxu0 %v223
  %v306 = vpop.f32.mrb[0].mxu0
  %v307 = vadd.f32 %v70, %v306
  %v308 = vpop.f32.mrb[0].mxu0
  %309 = vdwg.mxu0
  %v310 = vmax.f32 %v292, 0.0
  %v311 = vmax.f32 %v297, 0.0
  %v312 = vmax.f32 %v302, 0.0
  %v313 = vmax.f32 %v307, 0.0
  %v314 = vadd.f32 %v310, %v86
  %v315 = vadd.f32 %v311, %v87
  %v316 = vadd.f32 %v312, %v88
  %v317 = vadd.f32 %v313, %v89
  %vm318 = vcmask 130048
  %319 = vst.msk [vmem:[%s5] sm:$0xff] %vm318, %v314
  %320 = vst.msk [vmem:[%s5 + $0x8] sm:$0xff] %vm318, %v315
  %321 = vst.msk [vmem:[%s5 + $0x10] sm:$0xff] %vm318, %v316
  %322 = vst.msk [vmem:[%s5 + $0x18] sm:$0xff] %vm318, %v317
  %s323 = scalar_lea.vmem %s0, 32
  %v324 = vld [vmem:[%s323] sm:$0xff]
  %v325 = vld [vmem:[%s323 + $0x8] sm:$0xff]
  %v326 = vld [vmem:[%s323 + $0x10] sm:$0xff]
  %v327 = vld [vmem:[%s323 + $0x18] sm:$0xff]
  %332 = vrot.lane.b32.xlu0 %v324, 4
  %v333 = vpop.permute.xlu0 %332
  %334 = vrot.lane.b32.xlu0 %v325, 4
  %v335 = vpop.permute.xlu0 %334
  %336 = vrot.lane.b32.xlu0 %v326, 4
  %v337 = vpop.permute.xlu0 %336
  %338 = vrot.lane.b32.xlu0 %v327, 4
  %v339 = vpop.permute.xlu0 %338
  %v344 = vsel %vm106, 0.0, %v333
  %v345 = vsel %vm106, 0.0, %v335
  %v346 = vsel %vm106, 0.0, %v337
  %v347 = vsel %vm106, 0.0, %v339
  %v348 = vmul.f32 %v114, %v344
  %v349 = vmul.f32 %v119, %v345
  %v350 = vmul.f32 %v124, %v346
  %v351 = vmul.f32 %v129, %v347
  %v352 = vadd.f32 %v31, %v348
  %v353 = vadd.f32 %v36, %v349
  %v354 = vadd.f32 %v41, %v350
  %v355 = vadd.f32 %v46, %v351
  %356 = vrot.lane.b32.xlu0 %v324, 2
  %v357 = vpop.permute.xlu0 %356
  %358 = vrot.lane.b32.xlu0 %v325, 2
  %v359 = vpop.permute.xlu0 %358
  %360 = vrot.lane.b32.xlu0 %v326, 2
  %v361 = vpop.permute.xlu0 %360
  %362 = vrot.lane.b32.xlu0 %v327, 2
  %v363 = vpop.permute.xlu0 %362
  %v368 = vsel %vm151, 0.0, %v357
  %v369 = vsel %vm151, 0.0, %v359
  %v370 = vsel %vm151, 0.0, %v361
  %v371 = vsel %vm151, 0.0, %v363
  %v372 = vmul.f32 %v159, %v368
  %v373 = vmul.f32 %v164, %v369
  %v374 = vmul.f32 %v169, %v370
  %v375 = vmul.f32 %v174, %v371
  %v376 = vadd.f32 %v352, %v372
  %v377 = vadd.f32 %v353, %v373
  %v378 = vadd.f32 %v354, %v374
  %v379 = vadd.f32 %v355, %v375
  %v380 = vmul.f32 %v187, %v324
  %v381 = vmul.f32 %v192, %v325
  %v382 = vmul.f32 %v197, %v326
  %v383 = vmul.f32 %v202, %v327
  %v384 = vadd.f32 %v376, %v380
  %v385 = vadd.f32 %v377, %v381
  %v386 = vadd.f32 %v378, %v382
  %v387 = vadd.f32 %v379, %v383
  %388 = vmatprep.subr.mxu0 0.0
  %389 = vmatpush1.msra.mxu0 %v384
  %390 = vmatprep.subr.mxu0 0.0
  %391 = vmatpush1.msra.mxu0 %v385
  %392 = vmatprep.subr.mxu0 0.0
  %393 = vmatpush1.msra.mxu0 %v386
  %394 = vmatprep.subr.mxu0 0.0
  %395 = vmatpush1.msra.mxu0 %v387
  %396 = vmatprep.subr.mxu0 0.0
  %397 = vmatpush1.msra.mxu0 0.0
  %398 = vmatprep.subr.mxu0 0.0
  %399 = vmatpush1.msra.mxu0 0.0
  %400 = vmatprep.subr.mxu0 0.0
  %401 = vmatpush1.msra.mxu0 0.0
  %402 = vmatprep.subr.mxu0 0.0
  %403 = vmatpush1.msra.mxu0 0.0
  %404 = vmatprep.subr.mxu0 0.0
  %405 = vmatpush1.msra.mxu0 0.0
  %406 = vmatprep.subr.mxu0 0.0
  %407 = vmatpush1.msra.mxu0 0.0
  %408 = vmatprep.subr.mxu0 0.0
  %409 = vmatpush1.msra.mxu0 0.0
  %410 = vmatprep.subr.mxu0 0.0
  %411 = vmatpush1.msra.mxu0 0.0
  %412 = vmatprep.subr.mxu0 0.0
  %413 = vmatpush1.msra.mxu0 0.0
  %414 = vmatprep.subr.mxu0 0.0
  %415 = vmatpush1.msra.mxu0 0.0
  %416 = vmatprep.subr.mxu0 0.0
  %417 = vmatpush1.msra.mxu0 0.0
  %418 = vmatprep.subr.mxu0 0.0
  %419 = vmatpush1.msra.mxu0 0.0
  %420 = vmatprep.subr.mxu0 0.0
  %421 = vmatpush1.msra.mxu0 0.0
  %422 = vmatprep.subr.mxu0 0.0
  %423 = vmatpush1.msra.mxu0 0.0
  %424 = vmatprep.subr.mxu0 0.0
  %425 = vmatpush1.msra.mxu0 0.0
  %426 = vmatprep.subr.mxu0 0.0
  %427 = vmatpush1.msra.mxu0 0.0
  %428 = vmatprep.subr.mxu0 0.0
  %429 = vmatpush1.msra.mxu0 0.0
  %430 = vmatprep.subr.mxu0 0.0
  %431 = vmatpush1.msra.mxu0 0.0
  %432 = vmatprep.subr.mxu0 0.0
  %433 = vmatpush1.msra.mxu0 0.0
  %434 = vmatprep.subr.mxu0 0.0
  %435 = vmatpush1.msra.mxu0 0.0
  %436 = vmatprep.subr.mxu0 0.0
  %437 = vmatpush1.msra.mxu0 0.0
  %438 = vmatprep.subr.mxu0 0.0
  %439 = vmatpush1.msra.mxu0 0.0
  %440 = vmatprep.subr.mxu0 0.0
  %441 = vmatpush1.msra.mxu0 0.0
  %442 = vmatprep.subr.mxu0 0.0
  %443 = vmatpush1.msra.mxu0 0.0
  %444 = vmatprep.subr.mxu0 0.0
  %445 = vmatpush1.msra.mxu0 0.0
  %446 = vmatprep.subr.mxu0 0.0
  %447 = vmatpush1.msra.mxu0 0.0
  %448 = vmatprep.subr.mxu0 0.0
  %449 = vmatpush1.msra.mxu0 0.0
  %450 = vmatprep.subr.mxu0 0.0
  %451 = vmatpush1.msra.mxu0 0.0
  %452 = vmatprep.mubr.f32.mxu0 0.0
  %453 = vmatmul.mubr.f32.gmra.mrb[0].mxu0 %v214
  %v454 = vpop.f32.mrb[0].mxu0
  %v455 = vadd.f32 %v55, %v454
  %v456 = vpop.f32.mrb[0].mxu0
  %457 = vmatprep.mubr.f32.mxu0 0.0
  %458 = vmatmul.mubr.f32.gmra.mrb[0].mxu0 %v217
  %v459 = vpop.f32.mrb[0].mxu0
  %v460 = vadd.f32 %v60, %v459
  %v461 = vpop.f32.mrb[0].mxu0
  %462 = vmatprep.mubr.f32.mxu0 0.0
  %463 = vmatmul.mubr.f32.gmra.mrb[0].mxu0 %v220
  %v464 = vpop.f32.mrb[0].mxu0
  %v465 = vadd.f32 %v65, %v464
  %v466 = vpop.f32.mrb[0].mxu0
  %467 = vmatprep.mubr.f32.mxu0 0.0
  %468 = vmatmul.mubr.f32.gmra.mrb[0].mxu0 %v223
  %v469 = vpop.f32.mrb[0].mxu0
  %v470 = vadd.f32 %v70, %v469
  %v471 = vpop.f32.mrb[0].mxu0
  %472 = vdwg.mxu0
  %v473 = vmax.f32 %v455, 0.0
  %v474 = vmax.f32 %v460, 0.0
  %v475 = vmax.f32 %v465, 0.0
  %v476 = vmax.f32 %v470, 0.0
  %v477 = vadd.f32 %v473, %v324
  %v478 = vadd.f32 %v474, %v325
  %v479 = vadd.f32 %v475, %v326
  %v480 = vadd.f32 %v476, %v327
  %s481 = scalar_lea.vmem %s5, 32
  %482 = vst.msk [vmem:[%s481] sm:$0xff] %vm318, %v477
  %483 = vst.msk [vmem:[%s481 + $0x8] sm:$0xff] %vm318, %v478
  %484 = vst.msk [vmem:[%s481 + $0x10] sm:$0xff] %vm318, %v479
  %485 = vst.msk [vmem:[%s481 + $0x18] sm:$0xff] %vm318, %v480
  %s486 = scalar_lea.vmem %s0, 64
  %v487 = vld [vmem:[%s486] sm:$0xff]
  %v488 = vld [vmem:[%s486 + $0x8] sm:$0xff]
  %v489 = vld [vmem:[%s486 + $0x10] sm:$0xff]
  %v490 = vld [vmem:[%s486 + $0x18] sm:$0xff]
  %495 = vrot.lane.b32.xlu0 %v487, 4
  %v496 = vpop.permute.xlu0 %495
  %497 = vrot.lane.b32.xlu0 %v488, 4
  %v498 = vpop.permute.xlu0 %497
  %499 = vrot.lane.b32.xlu0 %v489, 4
  %v500 = vpop.permute.xlu0 %499
  %501 = vrot.lane.b32.xlu0 %v490, 4
  %v502 = vpop.permute.xlu0 %501
  %v507 = vsel %vm106, 0.0, %v496
  %v508 = vsel %vm106, 0.0, %v498
  %v509 = vsel %vm106, 0.0, %v500
  %v510 = vsel %vm106, 0.0, %v502
  %v511 = vmul.f32 %v114, %v507
  %v512 = vmul.f32 %v119, %v508
  %v513 = vmul.f32 %v124, %v509
  %v514 = vmul.f32 %v129, %v510
  %v515 = vadd.f32 %v31, %v511
  %v516 = vadd.f32 %v36, %v512
  %v517 = vadd.f32 %v41, %v513
  %v518 = vadd.f32 %v46, %v514
  %519 = vrot.lane.b32.xlu0 %v487, 2
  %v520 = vpop.permute.xlu0 %519
  %521 = vrot.lane.b32.xlu0 %v488, 2
  %v522 = vpop.permute.xlu0 %521
  %523 = vrot.lane.b32.xlu0 %v489, 2
  %v524 = vpop.permute.xlu0 %523
  %525 = vrot.lane.b32.xlu0 %v490, 2
  %v526 = vpop.permute.xlu0 %525
  %v531 = vsel %vm151, 0.0, %v520
  %v532 = vsel %vm151, 0.0, %v522
  %v533 = vsel %vm151, 0.0, %v524
  %v534 = vsel %vm151, 0.0, %v526
  %v535 = vmul.f32 %v159, %v531
  %v536 = vmul.f32 %v164, %v532
  %v537 = vmul.f32 %v169, %v533
  %v538 = vmul.f32 %v174, %v534
  %v539 = vadd.f32 %v515, %v535
  %v540 = vadd.f32 %v516, %v536
  %v541 = vadd.f32 %v517, %v537
  %v542 = vadd.f32 %v518, %v538
  %v543 = vmul.f32 %v187, %v487
  %v544 = vmul.f32 %v192, %v488
  %v545 = vmul.f32 %v197, %v489
  %v546 = vmul.f32 %v202, %v490
  %v547 = vadd.f32 %v539, %v543
  %v548 = vadd.f32 %v540, %v544
  %v549 = vadd.f32 %v541, %v545
  %v550 = vadd.f32 %v542, %v546
  %551 = vmatprep.subr.mxu0 0.0
  %552 = vmatpush1.msra.mxu0 %v547
  %553 = vmatprep.subr.mxu0 0.0
  %554 = vmatpush1.msra.mxu0 %v548
  %555 = vmatprep.subr.mxu0 0.0
  %556 = vmatpush1.msra.mxu0 %v549
  %557 = vmatprep.subr.mxu0 0.0
  %558 = vmatpush1.msra.mxu0 %v550
  %559 = vmatprep.subr.mxu0 0.0
  %560 = vmatpush1.msra.mxu0 0.0
  %561 = vmatprep.subr.mxu0 0.0
  %562 = vmatpush1.msra.mxu0 0.0
  %563 = vmatprep.subr.mxu0 0.0
  %564 = vmatpush1.msra.mxu0 0.0
  %565 = vmatprep.subr.mxu0 0.0
  %566 = vmatpush1.msra.mxu0 0.0
  %567 = vmatprep.subr.mxu0 0.0
  %568 = vmatpush1.msra.mxu0 0.0
  %569 = vmatprep.subr.mxu0 0.0
  %570 = vmatpush1.msra.mxu0 0.0
  %571 = vmatprep.subr.mxu0 0.0
  %572 = vmatpush1.msra.mxu0 0.0
  %573 = vmatprep.subr.mxu0 0.0
  %574 = vmatpush1.msra.mxu0 0.0
  %575 = vmatprep.subr.mxu0 0.0
  %576 = vmatpush1.msra.mxu0 0.0
  %577 = vmatprep.subr.mxu0 0.0
  %578 = vmatpush1.msra.mxu0 0.0
  %579 = vmatprep.subr.mxu0 0.0
  %580 = vmatpush1.msra.mxu0 0.0
  %581 = vmatprep.subr.mxu0 0.0
  %582 = vmatpush1.msra.mxu0 0.0
  %583 = vmatprep.subr.mxu0 0.0
  %584 = vmatpush1.msra.mxu0 0.0
  %585 = vmatprep.subr.mxu0 0.0
  %586 = vmatpush1.msra.mxu0 0.0
  %587 = vmatprep.subr.mxu0 0.0
  %588 = vmatpush1.msra.mxu0 0.0
  %589 = vmatprep.subr.mxu0 0.0
  %590 = vmatpush1.msra.mxu0 0.0
  %591 = vmatprep.subr.mxu0 0.0
  %592 = vmatpush1.msra.mxu0 0.0
  %593 = vmatprep.subr.mxu0 0.0
  %594 = vmatpush1.msra.mxu0 0.0
  %595 = vmatprep.subr.mxu0 0.0
  %596 = vmatpush1.msra.mxu0 0.0
  %597 = vmatprep.subr.mxu0 0.0
  %598 = vmatpush1.msra.mxu0 0.0
  %599 = vmatprep.subr.mxu0 0.0
  %600 = vmatpush1.msra.mxu0 0.0
  %601 = vmatprep.subr.mxu0 0.0
  %602 = vmatpush1.msra.mxu0 0.0
  %603 = vmatprep.subr.mxu0 0.0
  %604 = vmatpush1.msra.mxu0 0.0
  %605 = vmatprep.subr.mxu0 0.0
  %606 = vmatpush1.msra.mxu0 0.0
  %607 = vmatprep.subr.mxu0 0.0
  %608 = vmatpush1.msra.mxu0 0.0
  %609 = vmatprep.subr.mxu0 0.0
  %610 = vmatpush1.msra.mxu0 0.0
  %611 = vmatprep.subr.mxu0 0.0
  %612 = vmatpush1.msra.mxu0 0.0
  %613 = vmatprep.subr.mxu0 0.0
  %614 = vmatpush1.msra.mxu0 0.0
  %615 = vmatprep.mubr.f32.mxu0 0.0
  %616 = vmatmul.mubr.f32.gmra.mrb[0].mxu0 %v214
  %v617 = vpop.f32.mrb[0].mxu0
  %v618 = vadd.f32 %v55, %v617
  %v619 = vpop.f32.mrb[0].mxu0
  %620 = vmatprep.mubr.f32.mxu0 0.0
  %621 = vmatmul.mubr.f32.gmra.mrb[0].mxu0 %v217
  %v622 = vpop.f32.mrb[0].mxu0
  %v623 = vadd.f32 %v60, %v622
  %v624 = vpop.f32.mrb[0].mxu0
  %625 = vmatprep.mubr.f32.mxu0 0.0
  %626 = vmatmul.mubr.f32.gmra.mrb[0].mxu0 %v220
  %v627 = vpop.f32.mrb[0].mxu0
  %v628 = vadd.f32 %v65, %v627
  %v629 = vpop.f32.mrb[0].mxu0
  %630 = vmatprep.mubr.f32.mxu0 0.0
  %631 = vmatmul.mubr.f32.gmra.mrb[0].mxu0 %v223
  %v632 = vpop.f32.mrb[0].mxu0
  %v633 = vadd.f32 %v70, %v632
  %v634 = vpop.f32.mrb[0].mxu0
  %635 = vdwg.mxu0
  %v636 = vmax.f32 %v618, 0.0
  %v637 = vmax.f32 %v623, 0.0
  %v638 = vmax.f32 %v628, 0.0
  %v639 = vmax.f32 %v633, 0.0
  %v640 = vadd.f32 %v636, %v487
  %v641 = vadd.f32 %v637, %v488
  %v642 = vadd.f32 %v638, %v489
  %v643 = vadd.f32 %v639, %v490
  %s644 = scalar_lea.vmem %s5, 64
  %645 = vst.msk [vmem:[%s644] sm:$0xff] %vm318, %v640
  %646 = vst.msk [vmem:[%s644 + $0x8] sm:$0xff] %vm318, %v641
  %647 = vst.msk [vmem:[%s644 + $0x10] sm:$0xff] %vm318, %v642
  %648 = vst.msk [vmem:[%s644 + $0x18] sm:$0xff] %vm318, %v643
  %s649 = scalar_lea.vmem %s0, 96
  %v650 = vld [vmem:[%s649] sm:$0xff]
  %v651 = vld [vmem:[%s649 + $0x8] sm:$0xff]
  %v652 = vld [vmem:[%s649 + $0x10] sm:$0xff]
  %v653 = vld [vmem:[%s649 + $0x18] sm:$0xff]
  %658 = vrot.lane.b32.xlu0 %v650, 4
  %v659 = vpop.permute.xlu0 %658
  %660 = vrot.lane.b32.xlu0 %v651, 4
  %v661 = vpop.permute.xlu0 %660
  %662 = vrot.lane.b32.xlu0 %v652, 4
  %v663 = vpop.permute.xlu0 %662
  %664 = vrot.lane.b32.xlu0 %v653, 4
  %v665 = vpop.permute.xlu0 %664
  %v670 = vsel %vm106, 0.0, %v659
  %v671 = vsel %vm106, 0.0, %v661
  %v672 = vsel %vm106, 0.0, %v663
  %v673 = vsel %vm106, 0.0, %v665
  %v674 = vmul.f32 %v114, %v670
  %v675 = vmul.f32 %v119, %v671
  %v676 = vmul.f32 %v124, %v672
  %v677 = vmul.f32 %v129, %v673
  %v678 = vadd.f32 %v31, %v674
  %v679 = vadd.f32 %v36, %v675
  %v680 = vadd.f32 %v41, %v676
  %v681 = vadd.f32 %v46, %v677
  %682 = vrot.lane.b32.xlu0 %v650, 2
  %v683 = vpop.permute.xlu0 %682
  %684 = vrot.lane.b32.xlu0 %v651, 2
  %v685 = vpop.permute.xlu0 %684
  %686 = vrot.lane.b32.xlu0 %v652, 2
  %v687 = vpop.permute.xlu0 %686
  %688 = vrot.lane.b32.xlu0 %v653, 2
  %v689 = vpop.permute.xlu0 %688
  %v694 = vsel %vm151, 0.0, %v683
  %v695 = vsel %vm151, 0.0, %v685
  %v696 = vsel %vm151, 0.0, %v687
  %v697 = vsel %vm151, 0.0, %v689
  %v698 = vmul.f32 %v159, %v694
  %v699 = vmul.f32 %v164, %v695
  %v700 = vmul.f32 %v169, %v696
  %v701 = vmul.f32 %v174, %v697
  %v702 = vadd.f32 %v678, %v698
  %v703 = vadd.f32 %v679, %v699
  %v704 = vadd.f32 %v680, %v700
  %v705 = vadd.f32 %v681, %v701
  %v706 = vmul.f32 %v187, %v650
  %v707 = vmul.f32 %v192, %v651
  %v708 = vmul.f32 %v197, %v652
  %v709 = vmul.f32 %v202, %v653
  %v710 = vadd.f32 %v702, %v706
  %v711 = vadd.f32 %v703, %v707
  %v712 = vadd.f32 %v704, %v708
  %v713 = vadd.f32 %v705, %v709
  %714 = vmatprep.subr.mxu0 0.0
  %715 = vmatpush1.msra.mxu0 %v710
  %716 = vmatprep.subr.mxu0 0.0
  %717 = vmatpush1.msra.mxu0 %v711
  %718 = vmatprep.subr.mxu0 0.0
  %719 = vmatpush1.msra.mxu0 %v712
  %720 = vmatprep.subr.mxu0 0.0
  %721 = vmatpush1.msra.mxu0 %v713
  %722 = vmatprep.subr.mxu0 0.0
  %723 = vmatpush1.msra.mxu0 0.0
  %724 = vmatprep.subr.mxu0 0.0
  %725 = vmatpush1.msra.mxu0 0.0
  %726 = vmatprep.subr.mxu0 0.0
  %727 = vmatpush1.msra.mxu0 0.0
  %728 = vmatprep.subr.mxu0 0.0
  %729 = vmatpush1.msra.mxu0 0.0
  %730 = vmatprep.subr.mxu0 0.0
  %731 = vmatpush1.msra.mxu0 0.0
  %732 = vmatprep.subr.mxu0 0.0
  %733 = vmatpush1.msra.mxu0 0.0
  %734 = vmatprep.subr.mxu0 0.0
  %735 = vmatpush1.msra.mxu0 0.0
  %736 = vmatprep.subr.mxu0 0.0
  %737 = vmatpush1.msra.mxu0 0.0
  %738 = vmatprep.subr.mxu0 0.0
  %739 = vmatpush1.msra.mxu0 0.0
  %740 = vmatprep.subr.mxu0 0.0
  %741 = vmatpush1.msra.mxu0 0.0
  %742 = vmatprep.subr.mxu0 0.0
  %743 = vmatpush1.msra.mxu0 0.0
  %744 = vmatprep.subr.mxu0 0.0
  %745 = vmatpush1.msra.mxu0 0.0
  %746 = vmatprep.subr.mxu0 0.0
  %747 = vmatpush1.msra.mxu0 0.0
  %748 = vmatprep.subr.mxu0 0.0
  %749 = vmatpush1.msra.mxu0 0.0
  %750 = vmatprep.subr.mxu0 0.0
  %751 = vmatpush1.msra.mxu0 0.0
  %752 = vmatprep.subr.mxu0 0.0
  %753 = vmatpush1.msra.mxu0 0.0
  %754 = vmatprep.subr.mxu0 0.0
  %755 = vmatpush1.msra.mxu0 0.0
  %756 = vmatprep.subr.mxu0 0.0
  %757 = vmatpush1.msra.mxu0 0.0
  %758 = vmatprep.subr.mxu0 0.0
  %759 = vmatpush1.msra.mxu0 0.0
  %760 = vmatprep.subr.mxu0 0.0
  %761 = vmatpush1.msra.mxu0 0.0
  %762 = vmatprep.subr.mxu0 0.0
  %763 = vmatpush1.msra.mxu0 0.0
  %764 = vmatprep.subr.mxu0 0.0
  %765 = vmatpush1.msra.mxu0 0.0
  %766 = vmatprep.subr.mxu0 0.0
  %767 = vmatpush1.msra.mxu0 0.0
  %768 = vmatprep.subr.mxu0 0.0
  %769 = vmatpush1.msra.mxu0 0.0
  %770 = vmatprep.subr.mxu0 0.0
  %771 = vmatpush1.msra.mxu0 0.0
  %772 = vmatprep.subr.mxu0 0.0
  %773 = vmatpush1.msra.mxu0 0.0
  %774 = vmatprep.subr.mxu0 0.0
  %775 = vmatpush1.msra.mxu0 0.0
  %776 = vmatprep.subr.mxu0 0.0
  %777 = vmatpush1.msra.mxu0 0.0
  %778 = vmatprep.mubr.f32.mxu0 0.0
  %779 = vmatmul.mubr.f32.gmra.mrb[0].mxu0 %v214
  %v780 = vpop.f32.mrb[0].mxu0
  %v781 = vadd.f32 %v55, %v780
  %v782 = vpop.f32.mrb[0].mxu0
  %783 = vmatprep.mubr.f32.mxu0 0.0
  %784 = vmatmul.mubr.f32.gmra.mrb[0].mxu0 %v217
  %v785 = vpop.f32.mrb[0].mxu0
  %v786 = vadd.f32 %v60, %v785
  %v787 = vpop.f32.mrb[0].mxu0
  %788 = vmatprep.mubr.f32.mxu0 0.0
  %789 = vmatmul.mubr.f32.gmra.mrb[0].mxu0 %v220
  %v790 = vpop.f32.mrb[0].mxu0
  %v791 = vadd.f32 %v65, %v790
  %v792 = vpop.f32.mrb[0].mxu0
  %793 = vmatprep.mubr.f32.mxu0 0.0
  %794 = vmatmul.mubr.f32.gmra.mrb[0].mxu0 %v223
  %v795 = vpop.f32.mrb[0].mxu0
  %v796 = vadd.f32 %v70, %v795
  %v797 = vpop.f32.mrb[0].mxu0
  %798 = vdwg.mxu0
  %v799 = vmax.f32 %v781, 0.0
  %v800 = vmax.f32 %v786, 0.0
  %v801 = vmax.f32 %v791, 0.0
  %v802 = vmax.f32 %v796, 0.0
  %v803 = vadd.f32 %v799, %v650
  %v804 = vadd.f32 %v800, %v651
  %v805 = vadd.f32 %v801, %v652
  %v806 = vadd.f32 %v802, %v653
  %s807 = scalar_lea.vmem %s5, 96
  %808 = vst.msk [vmem:[%s807] sm:$0xff] %vm318, %v803
  %809 = vst.msk [vmem:[%s807 + $0x8] sm:$0xff] %vm318, %v804
  %810 = vst.msk [vmem:[%s807 + $0x10] sm:$0xff] %vm318, %v805
  %811 = vst.msk [vmem:[%s807 + $0x18] sm:$0xff] %vm318, %v806
  // Predicated region
  $region22: #{tpu_custom_call.1} parent=0 // pred_check
    _
  $region23: #{tpu_custom_call.1} parent=0 // pred_check_branch
    %813 = sbr.rel (0) target = $region25
  $region24: #{tpu_custom_call.1} parent=0 // pred_region
    _
  $region25: #{tpu_custom_call.1} parent=0 // pred_fallthru
    _
  // Predicated region
  $region26: #{tpu_custom_call.1} parent=0 // pred_check
    _
  $region27: #{tpu_custom_call.1} parent=0 // pred_check_branch
    %815 = sbr.rel (0) target = $region29
  $region28: #{tpu_custom_call.1} parent=0 // pred_region
    _
  $region29: #{tpu_custom_call.1} parent=0 // pred_fallthru
    _

</llo_original>
